<compile_context>
chip_gen: v7x
topology: tpu7x:2x2x1
jax: 0.10.0
libtpu: 0.0.40
codegen_flags: <defaults>
</compile_context>

<pallas_src>
import functools

import jax
import jax.numpy as jnp
from jax import lax
from jax.experimental import pallas as pl
from jax.experimental.pallas import tpu as pltpu


def _round_up(x, m):
    return ((x + m - 1) // m) * m


# Contract dim 1 of both operands: x(B, K) . W(N, K) -> (B, N) == x @ W.T for
# torch-layout Linear weights (out_features, in_features).
_DN = (((1,), (1,)), ((), ()))


def _vmem_capacity_bytes():
    try:
        return int(pltpu.get_tpu_info().vmem_capacity_bytes)
    except Exception:                       # interpret mode / older runtimes
        return 64 * 1024 * 1024             # v7x per-core VMEM (smallest gen)


def _choose_tile_b(batch, per_row_bytes, resident_bytes, budget_bytes):
    """Largest multiple-of-8 batch tile that fits VMEM and keeps >=2 steps."""
    if batch <= 8:
        return batch                        # full-extent block is always legal
    avail = max(budget_bytes - resident_bytes, 8 * per_row_bytes)
    cap = max(8, min(1024, (avail // per_row_bytes) // 8 * 8))
    # Keep >= 2 grid steps along the batch so both v7x TensorCores get work.
    half = _round_up(-(-batch // 2), 8)
    return int(max(8, min(cap, half)))


def _make_resident_kernel(n_parties):
    """Fused head with all weights resident in VMEM; grid = (batch tiles,)."""

    def kernel(*refs):
        z_refs = refs[:n_parties]
        w1_ref, b1_ref, w2_ref, b2_ref, w3_ref, b3_ref, o_ref = refs[n_parties:]

        # Concatenate the party features in VMEM (no HBM concat pass) + ReLU.
        if n_parties == 1:
            x = z_refs[0][...]
        else:
            x = jnp.concatenate([z[...] for z in z_refs], axis=-1)
        x = jnp.maximum(x, 0).astype(w1_ref.dtype)

        # Native-dtype MXU matmuls, f32 accumulation.
        h = lax.dot_general(x, w1_ref[...], _DN, preferred_element_type=jnp.float32)
        h = jnp.maximum(h + b1_ref[...], 0.0)
        h = lax.dot_general(h.astype(w2_ref.dtype), w2_ref[...], _DN,
                            preferred_element_type=jnp.float32)
        h = jnp.maximum(h + b2_ref[...], 0.0)
        h = lax.dot_general(h.astype(w3_ref.dtype), w3_ref[...], _DN,
                            preferred_element_type=jnp.float32)
        o_ref[...] = (h + b3_ref[...]).astype(o_ref.dtype)

    return kernel


def _ktiled_kernel(x_ref, w1_ref, b1_ref, w2_ref, b2_ref, w3_ref, b3_ref,
                   o_ref, acc_ref):
    """fc1 contraction tiled over grid axis 1 ("arbitrary"), f32 accumulator."""
    k = pl.program_id(1)

    @pl.when(k == 0)
    def _():
        acc_ref[...] = jnp.zeros_like(acc_ref)

    x = jnp.maximum(x_ref[...], 0).astype(w1_ref.dtype)
    acc_ref[...] += lax.dot_general(x, w1_ref[...], _DN,
                                    preferred_element_type=jnp.float32)

    @pl.when(k == pl.num_programs(1) - 1)
    def _():
        h = jnp.maximum(acc_ref[...] + b1_ref[...], 0.0)
        h = lax.dot_general(h.astype(w2_ref.dtype), w2_ref[...], _DN,
                            preferred_element_type=jnp.float32)
        h = jnp.maximum(h + b2_ref[...], 0.0)
        h = lax.dot_general(h.astype(w3_ref.dtype), w3_ref[...], _DN,
                            preferred_element_type=jnp.float32)
        o_ref[...] = (h + b3_ref[...]).astype(o_ref.dtype)


@functools.partial(jax.jit, static_argnames=("k_tile",))
def _forward(z_tuple, w1, b1, w2, b2, w3, b3, *, k_tile=None):
    zs = tuple(z_tuple)
    n = len(zs)
    B = zs[0].shape[0]
    dims = [z.shape[1] for z in zs]
    H = sum(dims)
    assert w1.shape == (H, H), "hidden_dim mismatch with concatenated inputs"
    H2, C = w2.shape[0], w3.shape[0]
    out_dtype = jnp.result_type(zs[0].dtype, w1.dtype)
    wsize = jnp.dtype(w1.dtype).itemsize
    osize = jnp.dtype(out_dtype).itemsize

    # Lane-dense output: pad num_classes (W3 rows / b3) up to a 128 multiple.
    Cp = _round_up(C, 128)
    if Cp != C:
        w3 = jnp.pad(w3, ((0, Cp - C), (0, 0)))
        b3 = jnp.pad(b3, (0, Cp - C))
    b1 = b1.reshape(1, H)
    b2 = b2.reshape(1, H2)
    b3 = b3.reshape(1, Cp)

    vmem_cap = _vmem_capacity_bytes()
    budget = int(vmem_cap * 0.8)

    # Resident-weight footprint (budget 2x even though constant-index blocks
    # request single buffering) and per-batch-row streaming bytes.
    w_bytes = 2 * wsize * (H * H + H * H2 + H2 * Cp + H + H2 + Cp)
    per_row = 2 * wsize * (H + Cp) + 4 * (2 * H + H2 + Cp)

    flops = 2 * B * (H * H + H * H2 + H2 * Cp)
    bytes_accessed = wsize * (B * H + H * H + H * H2 + H2 * Cp) + osize * B * Cp
    cost = pl.CostEstimate(flops=flops, transcendentals=0,
                           bytes_accessed=bytes_accessed)

    def const_spec(shape, n_grid_axes):
        idx = (lambda i: (0, 0)) if n_grid_axes == 1 else (lambda i, k: (0, 0))
        # Block index never changes -> no double buffering needed.
        return pl.BlockSpec(shape, idx, pipeline_mode=pl.Buffered(1))

    use_ktiling = (k_tile is not None) or (w_bytes + 16 * per_row > budget)

    if not use_ktiling:
        tile_b = _choose_tile_b(B, per_row, w_bytes, budget)
        vmem_limit = int(min(max(2 * (w_bytes + tile_b * per_row) + (4 << 20),
                                 32 << 20),
                             int(vmem_cap * 0.9)))
        in_specs = [pl.BlockSpec((tile_b, d), lambda i: (i, 0)) for d in dims]
        in_specs += [const_spec((H, H), 1), const_spec((1, H), 1),
                     const_spec((H2, H), 1), const_spec((1, H2), 1),
                     const_spec((Cp, H2), 1), const_spec((1, Cp), 1)]
        out = pl.pallas_call(
            _make_resident_kernel(n),
            out_shape=jax.ShapeDtypeStruct((B, Cp), out_dtype),
            grid_spec=pltpu.PrefetchScalarGridSpec(
                num_scalar_prefetch=0,
                grid=(pl.cdiv(B, tile_b),),
                in_specs=in_specs,
                out_specs=pl.BlockSpec((tile_b, Cp), lambda i: (i, 0)),
            ),
            compiler_params=pltpu.CompilerParams(
                dimension_semantics=("parallel",),
                vmem_limit_bytes=vmem_limit,
            ),
            cost_estimate=cost,
        )(*zs, w1, b1, w2, b2, w3, b3)
    else:
        # fc1 contraction tiled over a trailing "arbitrary" grid axis so W1
        # never has to be fully VMEM-resident (v7x 64 MiB budget at large H).
        x = zs[0] if n == 1 else jnp.concatenate(zs, axis=1)
        tk = 512 if k_tile is None else int(k_tile)
        tk = min(_round_up(max(tk, 128), 128), _round_up(H, 128))
        Hk = _round_up(H, tk)
        if Hk != H:        # zero-pad the contraction dim so K tiles divide it
            x = jnp.pad(x, ((0, 0), (0, Hk - H)))
            w1 = jnp.pad(w1, ((0, 0), (0, Hk - H)))

        res_k = 2 * wsize * (H * tk + H2 * H + Cp * H2 + H + H2 + Cp)
        per_row_k = 2 * wsize * (tk + Cp) + 4 * (2 * H + H2 + Cp)
        tile_b = _choose_tile_b(B, per_row_k, res_k, budget)
        vmem_limit = int(min(max(2 * (res_k + tile_b * per_row_k) + (4 << 20),
                                 32 << 20),
                             int(vmem_cap * 0.9)))
        out = pl.pallas_call(
            _ktiled_kernel,
            out_shape=jax.ShapeDtypeStruct((B, Cp), out_dtype),
            grid_spec=pltpu.PrefetchScalarGridSpec(
                num_scalar_prefetch=0,
                grid=(pl.cdiv(B, tile_b), Hk // tk),
                in_specs=[
                    pl.BlockSpec((tile_b, tk), lambda i, k: (i, k)),
                    pl.BlockSpec((H, tk), lambda i, k: (0, k)),
                    const_spec((1, H), 2), const_spec((H2, H), 2),
                    const_spec((1, H2), 2), const_spec((Cp, H2), 2),
                    const_spec((1, Cp), 2),
                ],
                out_specs=pl.BlockSpec((tile_b, Cp), lambda i, k: (i, 0)),
                scratch_shapes=[pltpu.VMEM((tile_b, H), jnp.float32)],
            ),
            compiler_params=pltpu.CompilerParams(
                dimension_semantics=("parallel", "arbitrary"),
                vmem_limit_bytes=vmem_limit,
            ),
            cost_estimate=cost,
        )(x, w1, b1, w2, b2, w3, b3)

    return out[:, :C] if Cp != C else out


def classification_model_host_trainable_head3(z_list, params, *, k_tile=None):
    """JAX/Pallas equivalent of ClassificationModelHostTrainableHead3.forward.

    Args:
      z_list: list of (batch, d_i) arrays with sum(d_i) == hidden_dim.
      params: dict with torch-layout weights:
        w1 (H, H), b1 (H,), w2 (H//2, H), b2 (H//2,), w3 (C, H//2), b3 (C,)
      k_tile: optional contraction-tile override (forces the K-tiled fc1 path).
    Returns:
      (batch, num_classes) logits.
    """
    return _forward(tuple(z_list), params["w1"], params["b1"],
                    params["w2"], params["b2"], params["w3"], params["b3"],
                    k_tile=k_tile)


def _reference(z_list, params):
    x = jnp.maximum(jnp.concatenate(z_list, axis=1), 0.0)
    x = jnp.maximum(x @ params["w1"].T + params["b1"], 0.0)
    x = jnp.maximum(x @ params["w2"].T + params["b2"], 0.0)
    return x @ params["w3"].T + params["b3"]


if __name__ == "__main__":
    key = jax.random.PRNGKey(0)

    def make_case(k, batch, hidden_dim, num_classes, n_parties):
        H2 = hidden_dim // 2
        part = hidden_dim // n_parties
        keys = jax.random.split(k, n_parties + 6)
        z_list = [jax.random.normal(keys[i], (batch, part), jnp.float32)
                  for i in range(n_parties)]
        p = keys[n_parties:]
        params = {
            "w1": 0.1 * jax.random.normal(p[0], (hidden_dim, hidden_dim), jnp.float32),
            "b1": 0.1 * jax.random.normal(p[1], (hidden_dim,), jnp.float32),
            "w2": 0.1 * jax.random.normal(p[2], (H2, hidden_dim), jnp.float32),
            "b2": 0.1 * jax.random.normal(p[3], (H2,), jnp.float32),
            "w3": 0.1 * jax.random.normal(p[4], (num_classes, H2), jnp.float32),
            "b3": 0.1 * jax.random.normal(p[5], (num_classes,), jnp.float32),
        }
        return z_list, params

    k1, k2 = jax.random.split(key)

    # Case 1: small shapes, default fully-weight-resident path.
    z_list, params = make_case(k1, batch=2, hidden_dim=32, num_classes=4,
                               n_parties=2)
    out = jax.block_until_ready(
        classification_model_host_trainable_head3(z_list, params))
    ref = _reference(z_list, params)
    assert out.shape == ref.shape
    assert jnp.allclose(out, ref, atol=1e-3, rtol=1e-3)

    # Case 2: force the K-tiled fc1 path (2 K steps, ragged last batch tile).
    z_list2, params2 = make_case(k2, batch=20, hidden_dim=256, num_classes=4,
                                 n_parties=2)
    out2 = jax.block_until_ready(
        classification_model_host_trainable_head3(z_list2, params2, k_tile=128))
    ref2 = _reference(z_list2, params2)
    assert out2.shape == ref2.shape
    assert jnp.allclose(out2, ref2, atol=1e-3, rtol=1e-3)

    print("KERNEL_OK")
</pallas_src>

<mosaic_0001>
module attributes {stable_mosaic.version = 11 : i64} {
  func.func @kernel(%arg0: i32, %arg1: memref<2x16xf32, #tpu.memory_space<vmem>>, %arg2: memref<2x16xf32, #tpu.memory_space<vmem>>, %arg3: memref<32x32xf32, #tpu.memory_space<vmem>>, %arg4: memref<1x32xf32, #tpu.memory_space<vmem>>, %arg5: memref<16x32xf32, #tpu.memory_space<vmem>>, %arg6: memref<1x16xf32, #tpu.memory_space<vmem>>, %arg7: memref<128x16xf32, #tpu.memory_space<vmem>>, %arg8: memref<1x128xf32, #tpu.memory_space<vmem>>, %arg9: memref<2x128xf32, #tpu.memory_space<vmem>>) attributes {dimension_semantics = [#tpu.dimension_semantics<parallel>], iteration_bounds = array<i64: 1>, scalar_prefetch = 0 : i64, scratch_operands = 0 : i64, tpu.core_type = #tpu.core_type<tc>, window_params = [{transform_indices = @transform_0, window_bounds = array<i64: 2, 16>}, {transform_indices = @transform_1, window_bounds = array<i64: 2, 16>}, {pipeline_mode = #tpu.pipeline_mode<synchronous>, transform_indices = @transform_2, window_bounds = array<i64: 32, 32>}, {pipeline_mode = #tpu.pipeline_mode<synchronous>, transform_indices = @transform_3, window_bounds = array<i64: 1, 32>}, {pipeline_mode = #tpu.pipeline_mode<synchronous>, transform_indices = @transform_4, window_bounds = array<i64: 16, 32>}, {pipeline_mode = #tpu.pipeline_mode<synchronous>, transform_indices = @transform_5, window_bounds = array<i64: 1, 16>}, {pipeline_mode = #tpu.pipeline_mode<synchronous>, transform_indices = @transform_6, window_bounds = array<i64: 128, 16>}, {pipeline_mode = #tpu.pipeline_mode<synchronous>, transform_indices = @transform_7, window_bounds = array<i64: 1, 128>}, {transform_indices = @transform_8, window_bounds = array<i64: 2, 128>}]} {
    %c0 = arith.constant 0 : index
    %c0_0 = arith.constant 0 : index
    %0 = vector.load %arg1[%c0, %c0_0] : memref<2x16xf32, #tpu.memory_space<vmem>>, vector<2x16xf32>
    %c0_1 = arith.constant 0 : index
    %c0_2 = arith.constant 0 : index
    %1 = vector.load %arg2[%c0_1, %c0_2] : memref<2x16xf32, #tpu.memory_space<vmem>>, vector<2x16xf32>
    %2 = tpu.concatenate %0, %1 in 1 : vector<2x16xf32>, vector<2x16xf32> -> vector<2x32xf32>
    %cst = arith.constant 0.000000e+00 : f32
    %3 = vector.broadcast %cst : f32 to vector<2x32xf32>
    %4 = arith.maximumf %2, %3 : vector<2x32xf32>
    %c0_3 = arith.constant 0 : index
    %c0_4 = arith.constant 0 : index
    %5 = vector.load %arg3[%c0_3, %c0_4] : memref<32x32xf32, #tpu.memory_space<vmem>>, vector<32x32xf32>
    %cst_5 = arith.constant dense<0.000000e+00> : vector<2x32xf32>
    %6 = tpu.matmul %4, %5, %cst_5 {dimension_numbers = #tpu.dot_dimension_numbers<[1], [1], [0], [0], [0, 0, 1, 0], [], []>} : vector<2x32xf32>, vector<32x32xf32>, vector<2x32xf32> -> vector<2x32xf32>
    %c0_6 = arith.constant 0 : index
    %c0_7 = arith.constant 0 : index
    %7 = vector.load %arg4[%c0_6, %c0_7] : memref<1x32xf32, #tpu.memory_space<vmem>>, vector<1x32xf32>
    %8 = vector.broadcast %7 : vector<1x32xf32> to vector<2x32xf32>
    %9 = arith.addf %6, %8 : vector<2x32xf32>
    %cst_8 = arith.constant 0.000000e+00 : f32
    %10 = vector.broadcast %cst_8 : f32 to vector<2x32xf32>
    %11 = arith.maximumf %9, %10 : vector<2x32xf32>
    %c0_9 = arith.constant 0 : index
    %c0_10 = arith.constant 0 : index
    %12 = vector.load %arg5[%c0_9, %c0_10] : memref<16x32xf32, #tpu.memory_space<vmem>>, vector<16x32xf32>
    %cst_11 = arith.constant dense<0.000000e+00> : vector<2x16xf32>
    %13 = tpu.matmul %11, %12, %cst_11 {dimension_numbers = #tpu.dot_dimension_numbers<[1], [1], [0], [0], [0, 0, 1, 0], [], []>} : vector<2x32xf32>, vector<16x32xf32>, vector<2x16xf32> -> vector<2x16xf32>
    %c0_12 = arith.constant 0 : index
    %c0_13 = arith.constant 0 : index
    %14 = vector.load %arg6[%c0_12, %c0_13] : memref<1x16xf32, #tpu.memory_space<vmem>>, vector<1x16xf32>
    %15 = vector.broadcast %14 : vector<1x16xf32> to vector<2x16xf32>
    %16 = arith.addf %13, %15 : vector<2x16xf32>
    %cst_14 = arith.constant 0.000000e+00 : f32
    %17 = vector.broadcast %cst_14 : f32 to vector<2x16xf32>
    %18 = arith.maximumf %16, %17 : vector<2x16xf32>
    %c0_15 = arith.constant 0 : index
    %c0_16 = arith.constant 0 : index
    %19 = vector.load %arg7[%c0_15, %c0_16] : memref<128x16xf32, #tpu.memory_space<vmem>>, vector<128x16xf32>
    %cst_17 = arith.constant dense<0.000000e+00> : vector<2x128xf32>
    %20 = tpu.matmul %18, %19, %cst_17 {dimension_numbers = #tpu.dot_dimension_numbers<[1], [1], [0], [0], [0, 0, 1, 0], [], []>} : vector<2x16xf32>, vector<128x16xf32>, vector<2x128xf32> -> vector<2x128xf32>
    %c0_18 = arith.constant 0 : index
    %c0_19 = arith.constant 0 : index
    %21 = vector.load %arg8[%c0_18, %c0_19] : memref<1x128xf32, #tpu.memory_space<vmem>>, vector<1x128xf32>
    %22 = vector.broadcast %21 : vector<1x128xf32> to vector<2x128xf32>
    %23 = arith.addf %20, %22 : vector<2x128xf32>
    %c0_20 = arith.constant 0 : index
    %c0_21 = arith.constant 0 : index
    %24 = vector.load %arg9[%c0_20, %c0_21] : memref<2x128xf32, #tpu.memory_space<vmem>>, vector<2x128xf32>
    tpu.vector_store %arg9[%c0_20, %c0_21], %23 {strides = array<i32>} : memref<2x128xf32, #tpu.memory_space<vmem>>, vector<2x128xf32>,
    return
  }
  func.func @transform_0(%arg0: i32) -> (i32, i32) {
    %c0_i32 = arith.constant 0 : i32
    %c0_i32_0 = arith.constant 0 : i32
    return %arg0, %c0_i32 : i32, i32
  }
  func.func @transform_1(%arg0: i32) -> (i32, i32) {
    %c0_i32 = arith.constant 0 : i32
    %c0_i32_0 = arith.constant 0 : i32
    return %arg0, %c0_i32 : i32, i32
  }
  func.func @transform_2(%arg0: i32) -> (i32, i32) {
    %c0_i32 = arith.constant 0 : i32
    %c0_i32_0 = arith.constant 0 : i32
    %c0_i32_1 = arith.constant 0 : i32
    return %c0_i32, %c0_i32_0 : i32, i32
  }
  func.func @transform_3(%arg0: i32) -> (i32, i32) {
    %c0_i32 = arith.constant 0 : i32
    %c0_i32_0 = arith.constant 0 : i32
    %c0_i32_1 = arith.constant 0 : i32
    return %c0_i32, %c0_i32_0 : i32, i32
  }
  func.func @transform_4(%arg0: i32) -> (i32, i32) {
    %c0_i32 = arith.constant 0 : i32
    %c0_i32_0 = arith.constant 0 : i32
    %c0_i32_1 = arith.constant 0 : i32
    return %c0_i32, %c0_i32_0 : i32, i32
  }
  func.func @transform_5(%arg0: i32) -> (i32, i32) {
    %c0_i32 = arith.constant 0 : i32
    %c0_i32_0 = arith.constant 0 : i32
    %c0_i32_1 = arith.constant 0 : i32
    return %c0_i32, %c0_i32_0 : i32, i32
  }
  func.func @transform_6(%arg0: i32) -> (i32, i32) {
    %c0_i32 = arith.constant 0 : i32
    %c0_i32_0 = arith.constant 0 : i32
    %c0_i32_1 = arith.constant 0 : i32
    return %c0_i32, %c0_i32_0 : i32, i32
  }
  func.func @transform_7(%arg0: i32) -> (i32, i32) {
    %c0_i32 = arith.constant 0 : i32
    %c0_i32_0 = arith.constant 0 : i32
    %c0_i32_1 = arith.constant 0 : i32
    return %c0_i32, %c0_i32_0 : i32, i32
  }
  func.func @transform_8(%arg0: i32) -> (i32, i32) {
    %c0_i32 = arith.constant 0 : i32
    %c0_i32_0 = arith.constant 0 : i32
    return %arg0, %c0_i32 : i32, i32
  }
}

</mosaic_0001>

<llo_original>
// kernel: _forward.1
$region0: #{_forward.1}
  #allocation0 [shape = 'u32[]', space=smem, size = 0x4, offset = 0x4, fixed_abs, tag = 'smem constant byte address 0x4 - core index']
  #allocation1 [shape = 'u32[144,128]{1,0:T(1,128)}', space=vmem, size = 0x12000, scoped, tag = 'internal scratch']
  %s0 = inlined_call_operand.vmem [shape: f32[2,16], index: 0, kind: input, shape index: {}]
  %s1 = inlined_call_operand.vmem [shape: f32[2,16], index: 1, kind: input, shape index: {}]
  %s2 = inlined_call_operand.vmem [shape: f32[32,32], index: 2, kind: input, shape index: {}]
  %s3 = inlined_call_operand.vmem [shape: f32[1,32], index: 3, kind: input, shape index: {}]
  %s4 = inlined_call_operand.vmem [shape: f32[16,32], index: 4, kind: input, shape index: {}]
  %s5 = inlined_call_operand.vmem [shape: f32[1,16], index: 5, kind: input, shape index: {}]
  %s6 = inlined_call_operand.vmem [shape: f32[128,16], index: 6, kind: input, shape index: {}]
  %s7 = inlined_call_operand.vmem [shape: f32[1,128], index: 7, kind: input, shape index: {}]
  %s8 = inlined_call_operand.hbm [shape: f32[2,128], index: 8, kind: output, shape index: {}]
  %s9 = sld [smem:[#allocation0]]
  $region42: #{_forward.1} parent=0
    _
  %s11 = ssub.s32 1, %s9
  %s12 = scalar_select 0, %s11, %s9
  $region1: #{_forward.1} parent=0
    #allocation2 [shape = 'u8[1024]{0}', space=vmem, size = 0x400, scoped, tag = 'output window, operand 0, single buffered']
    #allocation3 [shape = 's32[1]{0}', space=sflag, size = 0x4, scoped, tag = 'scoped memory for _forward.1']
    %13 = vsyncpa [#allocation3], 0
    // Predicated region
    $region2: #{_forward.1} parent=1 // pred_check
      _
    $region3: #{_forward.1} parent=1 // pred_check_branch
      %15 = sbr.rel (0) target = $region5
    $region4: #{_forward.1} parent=1 // pred_region
      _
    $region5: #{_forward.1} parent=1 // pred_fallthru
      _
    // Predicated region
    $region6: #{_forward.1} parent=1 // pred_check
      _
    $region7: #{_forward.1} parent=1 // pred_check_branch
      %17 = sbr.rel (0) target = $region9
    $region8: #{_forward.1} parent=1 // pred_region
      _
    $region9: #{_forward.1} parent=1 // pred_fallthru
      _
    // Predicated region
    $region10: #{_forward.1} parent=1 // pred_check
      _
    $region11: #{_forward.1} parent=1 // pred_check_branch
      %19 = sbr.rel (0) target = $region13
    $region12: #{_forward.1} parent=1 // pred_region
      _
    $region13: #{_forward.1} parent=1 // pred_fallthru
      _
    // Predicated region
    $region14: #{_forward.1} parent=1 // pred_check
      _
    $region15: #{_forward.1} parent=1 // pred_check_branch
      %21 = sbr.rel (0) target = $region17
    $region16: #{_forward.1} parent=1 // pred_region
      _
    $region17: #{_forward.1} parent=1 // pred_fallthru
      _
    // Predicated region
    $region18: #{_forward.1} parent=1 // pred_check
      _
    $region19: #{_forward.1} parent=1 // pred_check_branch
      %23 = sbr.rel (0) target = $region21
    $region20: #{_forward.1} parent=1 // pred_region
      _
    $region21: #{_forward.1} parent=1 // pred_fallthru
      _
    // Predicated region
    $region22: #{_forward.1} parent=1 // pred_check
      _
    $region23: #{_forward.1} parent=1 // pred_check_branch
      %25 = sbr.rel (0) target = $region25
    $region24: #{_forward.1} parent=1 // pred_region
      _
    $region25: #{_forward.1} parent=1 // pred_fallthru
      _
    // Predicated region
    $region26: #{_forward.1} parent=1 // pred_check
      _
    $region27: #{_forward.1} parent=1 // pred_check_branch
      %27 = sbr.rel (0) target = $region29
    $region28: #{_forward.1} parent=1 // pred_region
      _
    $region29: #{_forward.1} parent=1 // pred_fallthru
      _
    // Predicated region
    $region30: #{_forward.1} parent=1 // pred_check
      _
    $region31: #{_forward.1} parent=1 // pred_check_branch
      %29 = sbr.rel (0) target = $region33
    $region32: #{_forward.1} parent=1 // pred_region
      _
    $region33: #{_forward.1} parent=1 // pred_fallthru
      _
    %v30 = vld [vmem:[%s0] sm:$0x3]
    %v31 = vld [vmem:[%s1] sm:$0x3]
    %33 = vrot.lane.b32.xlu0 %v31, 16
    %v34 = vpop.permute.xlu0 %33
    %vm36 = vcmask 130048
    %v37 = vsel %vm36, %v30, %v34
    %v38 = vmax.f32 %v37, 0.0
    %v39 = vld [vmem:[%s2] sm:$0xff]
    %v40 = vld [vmem:[%s2 + $0x8] sm:$0xff]
    %v41 = vld [vmem:[%s2 + $0x10] sm:$0xff]
    %v42 = vld [vmem:[%s2 + $0x18] sm:$0xff]
    %v43 = vld [vmem:[%s3] sm:$0x1]
    %v45 = vlaneseq
    %v46 = vshrl.u32 %v45, 7
    %v47 = vsub.s32 0, %v46
    %v48 = vrot.slane %v43, %v47
    %vm50 = vcmask 261120
    %v52 = vsel %vm50, %v38, 0
    %v55 = vsel %vm50, %v39, 0
    %v58 = vsel %vm50, %v40, 0
    %v61 = vsel %vm50, %v41, 0
    %v64 = vsel %vm50, %v42, 0
    %66 = vmatprep.subr.mxu0 0.0
    %67 = vmatpush1.xpose.msra.mxu0 %v55
    %68 = vmatprep.subr.mxu0 0.0
    %69 = vmatpush1.xpose.msra.mxu0 %v58
    %70 = vmatprep.subr.mxu0 0.0
    %71 = vmatpush1.xpose.msra.mxu0 %v61
    %72 = vmatprep.subr.mxu0 0.0
    %73 = vmatpush1.xpose.msra.mxu0 %v64
    %74 = vmatprep.subr.mxu0 0.0
    %75 = vmatpush1.xpose.msra.mxu0 0.0
    %76 = vmatprep.subr.mxu0 0.0
    %77 = vmatpush1.xpose.msra.mxu0 0.0
    %78 = vmatprep.subr.mxu0 0.0
    %79 = vmatpush1.xpose.msra.mxu0 0.0
    %80 = vmatprep.subr.mxu0 0.0
    %81 = vmatpush1.xpose.msra.mxu0 0.0
    %82 = vmatprep.subr.mxu0 0.0
    %83 = vmatpush1.xpose.msra.mxu0 0.0
    %84 = vmatprep.subr.mxu0 0.0
    %85 = vmatpush1.xpose.msra.mxu0 0.0
    %86 = vmatprep.subr.mxu0 0.0
    %87 = vmatpush1.xpose.msra.mxu0 0.0
    %88 = vmatprep.subr.mxu0 0.0
    %89 = vmatpush1.xpose.msra.mxu0 0.0
    %90 = vmatprep.subr.mxu0 0.0
    %91 = vmatpush1.xpose.msra.mxu0 0.0
    %92 = vmatprep.subr.mxu0 0.0
    %93 = vmatpush1.xpose.msra.mxu0 0.0
    %94 = vmatprep.subr.mxu0 0.0
    %95 = vmatpush1.xpose.msra.mxu0 0.0
    %96 = vmatprep.subr.mxu0 0.0
    %97 = vmatpush1.xpose.msra.mxu0 0.0
    %98 = vmatprep.subr.mxu0 0.0
    %99 = vmatpush1.xpose.msra.mxu0 0.0
    %100 = vmatprep.subr.mxu0 0.0
    %101 = vmatpush1.xpose.msra.mxu0 0.0
    %102 = vmatprep.subr.mxu0 0.0
    %103 = vmatpush1.xpose.msra.mxu0 0.0
    %104 = vmatprep.subr.mxu0 0.0
    %105 = vmatpush1.xpose.msra.mxu0 0.0
    %106 = vmatprep.subr.mxu0 0.0
    %107 = vmatpush1.xpose.msra.mxu0 0.0
    %108 = vmatprep.subr.mxu0 0.0
    %109 = vmatpush1.xpose.msra.mxu0 0.0
    %110 = vmatprep.subr.mxu0 0.0
    %111 = vmatpush1.xpose.msra.mxu0 0.0
    %112 = vmatprep.subr.mxu0 0.0
    %113 = vmatpush1.xpose.msra.mxu0 0.0
    %114 = vmatprep.subr.mxu0 0.0
    %115 = vmatpush1.xpose.msra.mxu0 0.0
    %116 = vmatprep.subr.mxu0 0.0
    %117 = vmatpush1.xpose.msra.mxu0 0.0
    %118 = vmatprep.subr.mxu0 0.0
    %119 = vmatpush1.xpose.msra.mxu0 0.0
    %120 = vmatprep.subr.mxu0 0.0
    %121 = vmatpush1.xpose.msra.mxu0 0.0
    %122 = vmatprep.subr.mxu0 0.0
    %123 = vmatpush1.xpose.msra.mxu0 0.0
    %124 = vmatprep.subr.mxu0 0.0
    %125 = vmatpush1.xpose.msra.mxu0 0.0
    %126 = vmatprep.subr.mxu0 0.0
    %127 = vmatpush1.xpose.msra.mxu0 0.0
    %128 = vmatprep.subr.mxu0 0.0
    %129 = vmatpush1.xpose.msra.mxu0 0.0
    %130 = vmatprep.mubr.f32.mxu0 0.0
    %131 = vmatmul.mubr.f32.gmra.mrb[0].mxu0 %v52
    %v132 = vpop.f32.mrb[0].mxu0
    %v133 = vadd.f32 %v48, %v132
    %v134 = vpop.f32.mrb[0].mxu0
    %135 = vdwg.mxu0
    %v136 = vmax.f32 %v133, 0.0
    %v137 = vld [vmem:[%s4] sm:$0xff]
    %v138 = vld [vmem:[%s4 + $0x8] sm:$0xff]
    %v139 = vld [vmem:[%s5] sm:$0x1]
    %v141 = vlaneseq
    %v142 = vshrl.u32 %v141, 7
    %v143 = vsub.s32 0, %v142
    %v144 = vrot.slane %v139, %v143
    %v147 = vsel %vm50, %v136, 0
    %v150 = vsel %vm50, %v137, 0
    %v153 = vsel %vm50, %v138, 0
    %155 = vmatprep.subr.mxu0 0.0
    %156 = vmatpush1.xpose.msra.mxu0 %v150
    %157 = vmatprep.subr.mxu0 0.0
    %158 = vmatpush1.xpose.msra.mxu0 %v153
    %159 = vmatprep.subr.mxu0 0.0
    %160 = vmatpush1.xpose.msra.mxu0 0.0
    %161 = vmatprep.subr.mxu0 0.0
    %162 = vmatpush1.xpose.msra.mxu0 0.0
    %163 = vmatprep.subr.mxu0 0.0
    %164 = vmatpush1.xpose.msra.mxu0 0.0
    %165 = vmatprep.subr.mxu0 0.0
    %166 = vmatpush1.xpose.msra.mxu0 0.0
    %167 = vmatprep.subr.mxu0 0.0
    %168 = vmatpush1.xpose.msra.mxu0 0.0
    %169 = vmatprep.subr.mxu0 0.0
    %170 = vmatpush1.xpose.msra.mxu0 0.0
    %171 = vmatprep.subr.mxu0 0.0
    %172 = vmatpush1.xpose.msra.mxu0 0.0
    %173 = vmatprep.subr.mxu0 0.0
    %174 = vmatpush1.xpose.msra.mxu0 0.0
    %175 = vmatprep.subr.mxu0 0.0
    %176 = vmatpush1.xpose.msra.mxu0 0.0
    %177 = vmatprep.subr.mxu0 0.0
    %178 = vmatpush1.xpose.msra.mxu0 0.0
    %179 = vmatprep.subr.mxu0 0.0
    %180 = vmatpush1.xpose.msra.mxu0 0.0
    %181 = vmatprep.subr.mxu0 0.0
    %182 = vmatpush1.xpose.msra.mxu0 0.0
    %183 = vmatprep.subr.mxu0 0.0
    %184 = vmatpush1.xpose.msra.mxu0 0.0
    %185 = vmatprep.subr.mxu0 0.0
    %186 = vmatpush1.xpose.msra.mxu0 0.0
    %187 = vmatprep.subr.mxu0 0.0
    %188 = vmatpush1.xpose.msra.mxu0 0.0
    %189 = vmatprep.subr.mxu0 0.0
    %190 = vmatpush1.xpose.msra.mxu0 0.0
    %191 = vmatprep.subr.mxu0 0.0
    %192 = vmatpush1.xpose.msra.mxu0 0.0
    %193 = vmatprep.subr.mxu0 0.0
    %194 = vmatpush1.xpose.msra.mxu0 0.0
    %195 = vmatprep.subr.mxu0 0.0
    %196 = vmatpush1.xpose.msra.mxu0 0.0
    %197 = vmatprep.subr.mxu0 0.0
    %198 = vmatpush1.xpose.msra.mxu0 0.0
    %199 = vmatprep.subr.mxu0 0.0
    %200 = vmatpush1.xpose.msra.mxu0 0.0
    %201 = vmatprep.subr.mxu0 0.0
    %202 = vmatpush1.xpose.msra.mxu0 0.0
    %203 = vmatprep.subr.mxu0 0.0
    %204 = vmatpush1.xpose.msra.mxu0 0.0
    %205 = vmatprep.subr.mxu0 0.0
    %206 = vmatpush1.xpose.msra.mxu0 0.0
    %207 = vmatprep.subr.mxu0 0.0
    %208 = vmatpush1.xpose.msra.mxu0 0.0
    %209 = vmatprep.subr.mxu0 0.0
    %210 = vmatpush1.xpose.msra.mxu0 0.0
    %211 = vmatprep.subr.mxu0 0.0
    %212 = vmatpush1.xpose.msra.mxu0 0.0
    %213 = vmatprep.subr.mxu0 0.0
    %214 = vmatpush1.xpose.msra.mxu0 0.0
    %215 = vmatprep.subr.mxu0 0.0
    %216 = vmatpush1.xpose.msra.mxu0 0.0
    %217 = vmatprep.subr.mxu0 0.0
    %218 = vmatpush1.xpose.msra.mxu0 0.0
    %219 = vmatprep.mubr.f32.mxu0 0.0
    %220 = vmatmul.mubr.f32.gmra.mrb[0].mxu0 %v147
    %v221 = vpop.f32.mrb[0].mxu0
    %v222 = vadd.f32 %v144, %v221
    %v223 = vpop.f32.mrb[0].mxu0
    %224 = vdwg.mxu0
    %v225 = vmax.f32 %v222, 0.0
    %v226 = vld [vmem:[%s6] sm:$0xff]
    %v227 = vld [vmem:[%s6 + $0x8] sm:$0xff]
    %v228 = vld [vmem:[%s6 + $0x10] sm:$0xff]
    %v229 = vld [vmem:[%s6 + $0x18] sm:$0xff]
    %v230 = vld [vmem:[%s6 + $0x20] sm:$0xff]
    %v231 = vld [vmem:[%s6 + $0x28] sm:$0xff]
    %v232 = vld [vmem:[%s6 + $0x30] sm:$0xff]
    %v233 = vld [vmem:[%s6 + $0x38] sm:$0xff]
    %v234 = vld [vmem:[%s6 + $0x40] sm:$0xff]
    %v235 = vld [vmem:[%s6 + $0x48] sm:$0xff]
    %v236 = vld [vmem:[%s6 + $0x50] sm:$0xff]
    %v237 = vld [vmem:[%s6 + $0x58] sm:$0xff]
    %v238 = vld [vmem:[%s6 + $0x60] sm:$0xff]
    %v239 = vld [vmem:[%s6 + $0x68] sm:$0xff]
    %v240 = vld [vmem:[%s6 + $0x70] sm:$0xff]
    %v241 = vld [vmem:[%s6 + $0x78] sm:$0xff]
    %v242 = vld [vmem:[%s7] sm:$0x1]
    %v244 = vlaneseq
    %v245 = vshrl.u32 %v244, 7
    %v246 = vsub.s32 0, %v245
    %v247 = vrot.slane %v242, %v246
    %v250 = vsel %vm36, %v225, 0
    %v253 = vsel %vm36, %v226, 0
    %v256 = vsel %vm36, %v227, 0
    %v259 = vsel %vm36, %v228, 0
    %v262 = vsel %vm36, %v229, 0
    %v265 = vsel %vm36, %v230, 0
    %v268 = vsel %vm36, %v231, 0
    %v271 = vsel %vm36, %v232, 0
    %v274 = vsel %vm36, %v233, 0
    %v277 = vsel %vm36, %v234, 0
    %v280 = vsel %vm36, %v235, 0
    %v283 = vsel %vm36, %v236, 0
    %v286 = vsel %vm36, %v237, 0
    %v289 = vsel %vm36, %v238, 0
    %v292 = vsel %vm36, %v239, 0
    %v295 = vsel %vm36, %v240, 0
    %v298 = vsel %vm36, %v241, 0
    %300 = vmatprep.subr.mxu0 0.0
    %301 = vmatpush1.xpose.msra.mxu0 %v253
    %302 = vmatprep.subr.mxu0 0.0
    %303 = vmatpush1.xpose.msra.mxu0 %v256
    %304 = vmatprep.subr.mxu0 0.0
    %305 = vmatpush1.xpose.msra.mxu0 %v259
    %306 = vmatprep.subr.mxu0 0.0
    %307 = vmatpush1.xpose.msra.mxu0 %v262
    %308 = vmatprep.subr.mxu0 0.0
    %309 = vmatpush1.xpose.msra.mxu0 %v265
    %310 = vmatprep.subr.mxu0 0.0
    %311 = vmatpush1.xpose.msra.mxu0 %v268
    %312 = vmatprep.subr.mxu0 0.0
    %313 = vmatpush1.xpose.msra.mxu0 %v271
    %314 = vmatprep.subr.mxu0 0.0
    %315 = vmatpush1.xpose.msra.mxu0 %v274
    %316 = vmatprep.subr.mxu0 0.0
    %317 = vmatpush1.xpose.msra.mxu0 %v277
    %318 = vmatprep.subr.mxu0 0.0
    %319 = vmatpush1.xpose.msra.mxu0 %v280
    %320 = vmatprep.subr.mxu0 0.0
    %321 = vmatpush1.xpose.msra.mxu0 %v283
    %322 = vmatprep.subr.mxu0 0.0
    %323 = vmatpush1.xpose.msra.mxu0 %v286
    %324 = vmatprep.subr.mxu0 0.0
    %325 = vmatpush1.xpose.msra.mxu0 %v289
    %326 = vmatprep.subr.mxu0 0.0
    %327 = vmatpush1.xpose.msra.mxu0 %v292
    %328 = vmatprep.subr.mxu0 0.0
    %329 = vmatpush1.xpose.msra.mxu0 %v295
    %330 = vmatprep.subr.mxu0 0.0
    %331 = vmatpush1.xpose.msra.mxu0 %v298
    %332 = vmatprep.subr.mxu0 0.0
    %333 = vmatpush1.xpose.msra.mxu0 0.0
    %334 = vmatprep.subr.mxu0 0.0
    %335 = vmatpush1.xpose.msra.mxu0 0.0
    %336 = vmatprep.subr.mxu0 0.0
    %337 = vmatpush1.xpose.msra.mxu0 0.0
    %338 = vmatprep.subr.mxu0 0.0
    %339 = vmatpush1.xpose.msra.mxu0 0.0
    %340 = vmatprep.subr.mxu0 0.0
    %341 = vmatpush1.xpose.msra.mxu0 0.0
    %342 = vmatprep.subr.mxu0 0.0
    %343 = vmatpush1.xpose.msra.mxu0 0.0
    %344 = vmatprep.subr.mxu0 0.0
    %345 = vmatpush1.xpose.msra.mxu0 0.0
    %346 = vmatprep.subr.mxu0 0.0
    %347 = vmatpush1.xpose.msra.mxu0 0.0
    %348 = vmatprep.subr.mxu0 0.0
    %349 = vmatpush1.xpose.msra.mxu0 0.0
    %350 = vmatprep.subr.mxu0 0.0
    %351 = vmatpush1.xpose.msra.mxu0 0.0
    %352 = vmatprep.subr.mxu0 0.0
    %353 = vmatpush1.xpose.msra.mxu0 0.0
    %354 = vmatprep.subr.mxu0 0.0
    %355 = vmatpush1.xpose.msra.mxu0 0.0
    %356 = vmatprep.subr.mxu0 0.0
    %357 = vmatpush1.xpose.msra.mxu0 0.0
    %358 = vmatprep.subr.mxu0 0.0
    %359 = vmatpush1.xpose.msra.mxu0 0.0
    %360 = vmatprep.subr.mxu0 0.0
    %361 = vmatpush1.xpose.msra.mxu0 0.0
    %362 = vmatprep.subr.mxu0 0.0
    %363 = vmatpush1.xpose.msra.mxu0 0.0
    %364 = vmatprep.mubr.f32.mxu0 0.0
    %365 = vmatmul.mubr.f32.gmra.mrb[0].mxu0 %v250
    %v366 = vpop.f32.mrb[0].mxu0
    %v367 = vadd.f32 %v247, %v366
    %v368 = vpop.f32.mrb[0].mxu0
    %369 = vdwg.mxu0
    %370 = vst [vmem:[#allocation2] sm:$0x3] %v367
    // Predicated region
    $region34: #{_forward.1} parent=1 // pred_check
      _
    $region35: #{_forward.1} parent=1 // pred_check_branch
      %372 = sbr.rel (0) target = $region37
    $region36: #{_forward.1} parent=1 // pred_region
      %s374 = ssub.s32 32, 32
      %375 = vsyncadd [#allocation3], %s374
      %s377 = sshll.u32 [#allocation2], 4
      %s378 = int_to_ptr.vmem [resolvable:$true] %s377
      %380 = dma.vmem_to_hbm [thread:$0]  %s378, 32, %s8, [#allocation3]
    $region37: #{_forward.1} parent=1 // pred_fallthru
      _
    // Predicated region
    $region38: #{_forward.1} parent=1 // pred_check
      _
    $region39: #{_forward.1} parent=1 // pred_check_branch
      %382 = sbr.rel (0) target = $region41
    $region40: #{_forward.1} parent=1 // pred_region
      %383 = dma.done [#allocation3], 32
    $region41: #{_forward.1} parent=1 // pred_fallthru
      _
    %384 = vsyncpa [#allocation3], 1

</llo_original>
